<compile_context>
chip_gen: v5e
topology: v5e:2x2
jax: 0.10.0
libtpu: 0.0.40
codegen_flags: <defaults>
</compile_context>

<pallas_src>
import functools

import jax
import jax.numpy as jnp
from jax.experimental import pallas as pl
from jax.experimental.pallas import tpu as pltpu

IN_DIM = 28 * 28   # 784 (logical)
HID = 64           # logical hidden width
OUT = 10           # logical number of classes

IN_PAD = 896       # 7 * 128  lane-dense input width
HID_PAD = 128      # lane-dense hidden width
OUT_PAD = 128      # lane-dense class width
NEG_INF = -1e30    # bias for padded class lanes (exp underflows to exactly 0)


def _round_up(n, m):
    return (n + m - 1) // m * m


def _mlp_kernel(x_ref,
                w1_ref, b1_ref,
                w2_ref, b2_ref,
                w3_ref, b3_ref,
                w4_ref, b4_ref,
                o_ref):
    """Entire Net.forward for one batch tile: 4x Linear + ReLU + log_softmax."""
    x = x_ref[...]

    h = jnp.dot(x, w1_ref[...], preferred_element_type=jnp.float32) + b1_ref[...]
    h = jnp.maximum(h, 0.0)

    h = jnp.dot(h, w2_ref[...], preferred_element_type=jnp.float32) + b2_ref[...]
    h = jnp.maximum(h, 0.0)

    h = jnp.dot(h, w3_ref[...], preferred_element_type=jnp.float32) + b3_ref[...]
    h = jnp.maximum(h, 0.0)

    logits = jnp.dot(h, w4_ref[...], preferred_element_type=jnp.float32) + b4_ref[...]

    # log_softmax over the class axis (last dim). Padded class lanes carry a
    # -1e30 bias, so exp(shifted) underflows to 0 there and the denominator is
    # exactly the sum over the 10 real classes.
    m = jnp.max(logits, axis=-1, keepdims=True)
    shifted = logits - m
    lse = jnp.log(jnp.sum(jnp.exp(shifted), axis=-1, keepdims=True))
    o_ref[...] = shifted - lse


@functools.partial(jax.jit, static_argnames=("batch_tile",))
def _forward_impl(x, padded_params, batch_tile):
    """x: (B, 784) f32. padded_params: lane-dense padded weights/biases."""
    B = x.shape[0]
    Bp = _round_up(B, batch_tile)

    # Zero-pad batch to a multiple of the tile and features 784 -> 896.
    x_pad = jnp.zeros((Bp, IN_PAD), jnp.float32)
    x_pad = x_pad.at[:B, :IN_DIM].set(x.astype(jnp.float32))

    grid = (Bp // batch_tile,)

    def full(shape):
        # Small, fully-resident operand: same (0, 0, ...) block every grid step.
        return pl.BlockSpec(shape, lambda i: tuple(0 for _ in shape))

    out_pad = pl.pallas_call(
        _mlp_kernel,
        out_shape=jax.ShapeDtypeStruct((Bp, OUT_PAD), jnp.float32),
        grid_spec=pltpu.PrefetchScalarGridSpec(
            num_scalar_prefetch=0,
            grid=grid,
            in_specs=[
                pl.BlockSpec((batch_tile, IN_PAD), lambda i: (i, 0)),   # x tile
                full((IN_PAD, HID_PAD)),  full((1, HID_PAD)),           # fc1
                full((HID_PAD, HID_PAD)), full((1, HID_PAD)),           # fc2
                full((HID_PAD, HID_PAD)), full((1, HID_PAD)),           # fc3
                full((HID_PAD, OUT_PAD)), full((1, OUT_PAD)),           # fc4
            ],
            out_specs=pl.BlockSpec((batch_tile, OUT_PAD), lambda i: (i, 0)),
        ),
        compiler_params=pltpu.CompilerParams(
            dimension_semantics=("parallel",)),
    )(x_pad,
      padded_params["w1"], padded_params["b1"],
      padded_params["w2"], padded_params["b2"],
      padded_params["w3"], padded_params["b3"],
      padded_params["w4"], padded_params["b4"])

    # Drop batch padding and the 118 padded class lanes.
    return out_pad[:B, :OUT]


def net_forward(x, padded_params, batch_tile=1024):
    """Public entry point. Picks a static batch tile (multiple of 8, capped at
    `batch_tile`) so small batches still compile to a single grid step."""
    bt = min(batch_tile, _round_up(x.shape[0], 8))
    return _forward_impl(x, padded_params, batch_tile=bt)


def init_params(key):
    """Deterministic init mimicking nn.Linear's U(-1/sqrt(fan_in), 1/sqrt(fan_in)).
    Weights are stored as (in_features, out_features) = PyTorch weight.T."""
    dims = [(IN_DIM, HID), (HID, HID), (HID, HID), (HID, OUT)]
    params = {}
    keys = jax.random.split(key, 2 * len(dims))
    for idx, (fan_in, fan_out) in enumerate(dims):
        bound = 1.0 / jnp.sqrt(fan_in)
        w = jax.random.uniform(keys[2 * idx], (fan_in, fan_out),
                               jnp.float32, -bound, bound)
        b = jax.random.uniform(keys[2 * idx + 1], (1, fan_out),
                               jnp.float32, -bound, bound)
        params[f"w{idx + 1}"] = w
        params[f"b{idx + 1}"] = b
    return params


def pad_params(params):
    """Zero-pad every weight/bias to lane-dense (multiple-of-128) shapes.
    fc4's padded bias lanes get -1e30 so they never affect log_softmax."""
    def pad2(a, rows, cols, fill=0.0):
        out = jnp.full((rows, cols), fill, jnp.float32)
        return out.at[:a.shape[0], :a.shape[1]].set(a.astype(jnp.float32))

    return {
        "w1": pad2(params["w1"], IN_PAD, HID_PAD),
        "b1": pad2(params["b1"], 1, HID_PAD),
        "w2": pad2(params["w2"], HID_PAD, HID_PAD),
        "b2": pad2(params["b2"], 1, HID_PAD),
        "w3": pad2(params["w3"], HID_PAD, HID_PAD),
        "b3": pad2(params["b3"], 1, HID_PAD),
        "w4": pad2(params["w4"], HID_PAD, OUT_PAD),
        "b4": pad2(params["b4"], 1, OUT_PAD, fill=NEG_INF),
    }


def reference_forward(x, params):
    h = jax.nn.relu(x @ params["w1"] + params["b1"])
    h = jax.nn.relu(h @ params["w2"] + params["b2"])
    h = jax.nn.relu(h @ params["w3"] + params["b3"])
    logits = h @ params["w4"] + params["b4"]
    return jax.nn.log_softmax(logits, axis=1)


if __name__ == "__main__":
    key = jax.random.PRNGKey(0)
    k_x, k_p = jax.random.split(key)

    B = 8  # small batch; x matches the flattened 28*28 input the module expects
    x = jax.random.normal(k_x, (B, IN_DIM), dtype=jnp.float32)

    params = init_params(k_p)           # logical (PyTorch-equivalent) params
    padded = pad_params(params)         # lane-dense padded copies for the kernel

    out = net_forward(x, padded)
    out = jax.block_until_ready(out)

    ref = reference_forward(x, params)
    assert out.shape == (B, OUT)
    assert jnp.allclose(out, ref, atol=1e-5, rtol=1e-5), "mismatch vs reference"

    print("KERNEL_OK")
</pallas_src>

<mosaic_0001>
module attributes {stable_mosaic.version = 11 : i64} {
  func.func @_mlp_kernel(%arg0: i32, %arg1: memref<8x896xf32, #tpu.memory_space<vmem>>, %arg2: memref<896x128xf32, #tpu.memory_space<vmem>>, %arg3: memref<1x128xf32, #tpu.memory_space<vmem>>, %arg4: memref<128x128xf32, #tpu.memory_space<vmem>>, %arg5: memref<1x128xf32, #tpu.memory_space<vmem>>, %arg6: memref<128x128xf32, #tpu.memory_space<vmem>>, %arg7: memref<1x128xf32, #tpu.memory_space<vmem>>, %arg8: memref<128x128xf32, #tpu.memory_space<vmem>>, %arg9: memref<1x128xf32, #tpu.memory_space<vmem>>, %arg10: memref<8x128xf32, #tpu.memory_space<vmem>>) attributes {dimension_semantics = [#tpu.dimension_semantics<parallel>], iteration_bounds = array<i64: 1>, scalar_prefetch = 0 : i64, scratch_operands = 0 : i64, tpu.core_type = #tpu.core_type<tc>, window_params = [{transform_indices = @transform_0, window_bounds = array<i64: 8, 896>}, {pipeline_mode = #tpu.pipeline_mode<synchronous>, transform_indices = @transform_1, window_bounds = array<i64: 896, 128>}, {pipeline_mode = #tpu.pipeline_mode<synchronous>, transform_indices = @transform_2, window_bounds = array<i64: 1, 128>}, {pipeline_mode = #tpu.pipeline_mode<synchronous>, transform_indices = @transform_3, window_bounds = array<i64: 128, 128>}, {pipeline_mode = #tpu.pipeline_mode<synchronous>, transform_indices = @transform_4, window_bounds = array<i64: 1, 128>}, {pipeline_mode = #tpu.pipeline_mode<synchronous>, transform_indices = @transform_5, window_bounds = array<i64: 128, 128>}, {pipeline_mode = #tpu.pipeline_mode<synchronous>, transform_indices = @transform_6, window_bounds = array<i64: 1, 128>}, {pipeline_mode = #tpu.pipeline_mode<synchronous>, transform_indices = @transform_7, window_bounds = array<i64: 128, 128>}, {pipeline_mode = #tpu.pipeline_mode<synchronous>, transform_indices = @transform_8, window_bounds = array<i64: 1, 128>}, {transform_indices = @transform_9, window_bounds = array<i64: 8, 128>}]} {
    %c0 = arith.constant 0 : index
    %c0_0 = arith.constant 0 : index
    %0 = vector.load %arg1[%c0, %c0_0] : memref<8x896xf32, #tpu.memory_space<vmem>>, vector<8x896xf32>
    %c0_1 = arith.constant 0 : index
    %c0_2 = arith.constant 0 : index
    %1 = vector.load %arg2[%c0_1, %c0_2] : memref<896x128xf32, #tpu.memory_space<vmem>>, vector<896x128xf32>
    %cst = arith.constant dense<0.000000e+00> : vector<8x128xf32>
    %2 = tpu.matmul %0, %1, %cst {dimension_numbers = #tpu.dot_dimension_numbers<[1], [0], [0], [1], [0, 0, 1, 1], [], []>} : vector<8x896xf32>, vector<896x128xf32>, vector<8x128xf32> -> vector<8x128xf32>
    %c0_3 = arith.constant 0 : index
    %c0_4 = arith.constant 0 : index
    %3 = vector.load %arg3[%c0_3, %c0_4] : memref<1x128xf32, #tpu.memory_space<vmem>>, vector<1x128xf32>
    %4 = vector.broadcast %3 : vector<1x128xf32> to vector<8x128xf32>
    %5 = arith.addf %2, %4 : vector<8x128xf32>
    %cst_5 = arith.constant 0.000000e+00 : f32
    %6 = vector.broadcast %cst_5 : f32 to vector<8x128xf32>
    %7 = arith.maximumf %5, %6 : vector<8x128xf32>
    %c0_6 = arith.constant 0 : index
    %c0_7 = arith.constant 0 : index
    %8 = vector.load %arg4[%c0_6, %c0_7] : memref<128x128xf32, #tpu.memory_space<vmem>>, vector<128x128xf32>
    %cst_8 = arith.constant dense<0.000000e+00> : vector<8x128xf32>
    %9 = tpu.matmul %7, %8, %cst_8 {dimension_numbers = #tpu.dot_dimension_numbers<[1], [0], [0], [1], [0, 0, 1, 1], [], []>} : vector<8x128xf32>, vector<128x128xf32>, vector<8x128xf32> -> vector<8x128xf32>
    %c0_9 = arith.constant 0 : index
    %c0_10 = arith.constant 0 : index
    %10 = vector.load %arg5[%c0_9, %c0_10] : memref<1x128xf32, #tpu.memory_space<vmem>>, vector<1x128xf32>
    %11 = vector.broadcast %10 : vector<1x128xf32> to vector<8x128xf32>
    %12 = arith.addf %9, %11 : vector<8x128xf32>
    %cst_11 = arith.constant 0.000000e+00 : f32
    %13 = vector.broadcast %cst_11 : f32 to vector<8x128xf32>
    %14 = arith.maximumf %12, %13 : vector<8x128xf32>
    %c0_12 = arith.constant 0 : index
    %c0_13 = arith.constant 0 : index
    %15 = vector.load %arg6[%c0_12, %c0_13] : memref<128x128xf32, #tpu.memory_space<vmem>>, vector<128x128xf32>
    %cst_14 = arith.constant dense<0.000000e+00> : vector<8x128xf32>
    %16 = tpu.matmul %14, %15, %cst_14 {dimension_numbers = #tpu.dot_dimension_numbers<[1], [0], [0], [1], [0, 0, 1, 1], [], []>} : vector<8x128xf32>, vector<128x128xf32>, vector<8x128xf32> -> vector<8x128xf32>
    %c0_15 = arith.constant 0 : index
    %c0_16 = arith.constant 0 : index
    %17 = vector.load %arg7[%c0_15, %c0_16] : memref<1x128xf32, #tpu.memory_space<vmem>>, vector<1x128xf32>
    %18 = vector.broadcast %17 : vector<1x128xf32> to vector<8x128xf32>
    %19 = arith.addf %16, %18 : vector<8x128xf32>
    %cst_17 = arith.constant 0.000000e+00 : f32
    %20 = vector.broadcast %cst_17 : f32 to vector<8x128xf32>
    %21 = arith.maximumf %19, %20 : vector<8x128xf32>
    %c0_18 = arith.constant 0 : index
    %c0_19 = arith.constant 0 : index
    %22 = vector.load %arg8[%c0_18, %c0_19] : memref<128x128xf32, #tpu.memory_space<vmem>>, vector<128x128xf32>
    %cst_20 = arith.constant dense<0.000000e+00> : vector<8x128xf32>
    %23 = tpu.matmul %21, %22, %cst_20 {dimension_numbers = #tpu.dot_dimension_numbers<[1], [0], [0], [1], [0, 0, 1, 1], [], []>} : vector<8x128xf32>, vector<128x128xf32>, vector<8x128xf32> -> vector<8x128xf32>
    %c0_21 = arith.constant 0 : index
    %c0_22 = arith.constant 0 : index
    %24 = vector.load %arg9[%c0_21, %c0_22] : memref<1x128xf32, #tpu.memory_space<vmem>>, vector<1x128xf32>
    %25 = vector.broadcast %24 : vector<1x128xf32> to vector<8x128xf32>
    %26 = arith.addf %23, %25 : vector<8x128xf32>
    %cst_23 = arith.constant dense<0xFF800000> : vector<8xf32>
    %27 = vector.multi_reduction <maximumf>, %26, %cst_23 [1] : vector<8x128xf32> to vector<8xf32>
    %28 = vector.shape_cast %27 : vector<8xf32> to vector<8x1xf32>
    %29 = vector.broadcast %28 : vector<8x1xf32> to vector<8x128xf32>
    %30 = arith.subf %26, %29 : vector<8x128xf32>
    %31 = math.exp %30 : vector<8x128xf32>
    %cst_24 = arith.constant dense<0.000000e+00> : vector<8xf32>
    %32 = vector.multi_reduction <add>, %31, %cst_24 [1] : vector<8x128xf32> to vector<8xf32>
    %33 = vector.shape_cast %32 : vector<8xf32> to vector<8x1xf32>
    %34 = math.log %33 : vector<8x1xf32>
    %35 = vector.broadcast %34 : vector<8x1xf32> to vector<8x128xf32>
    %36 = arith.subf %30, %35 : vector<8x128xf32>
    %c0_25 = arith.constant 0 : index
    %c0_26 = arith.constant 0 : index
    %37 = vector.load %arg10[%c0_25, %c0_26] : memref<8x128xf32, #tpu.memory_space<vmem>>, vector<8x128xf32>
    tpu.vector_store %arg10[%c0_25, %c0_26], %36 {strides = array<i32>} : memref<8x128xf32, #tpu.memory_space<vmem>>, vector<8x128xf32>,
    return
  }
  func.func @transform_0(%arg0: i32) -> (i32, i32) {
    %c0_i32 = arith.constant 0 : i32
    %c0_i32_0 = arith.constant 0 : i32
    return %arg0, %c0_i32 : i32, i32
  }
  func.func @transform_1(%arg0: i32) -> (i32, i32) {
    %c0_i32 = arith.constant 0 : i32
    %c0_i32_0 = arith.constant 0 : i32
    %c0_i32_1 = arith.constant 0 : i32
    return %c0_i32, %c0_i32_0 : i32, i32
  }
  func.func @transform_2(%arg0: i32) -> (i32, i32) {
    %c0_i32 = arith.constant 0 : i32
    %c0_i32_0 = arith.constant 0 : i32
    %c0_i32_1 = arith.constant 0 : i32
    return %c0_i32, %c0_i32_0 : i32, i32
  }
  func.func @transform_3(%arg0: i32) -> (i32, i32) {
    %c0_i32 = arith.constant 0 : i32
    %c0_i32_0 = arith.constant 0 : i32
    %c0_i32_1 = arith.constant 0 : i32
    return %c0_i32, %c0_i32_0 : i32, i32
  }
  func.func @transform_4(%arg0: i32) -> (i32, i32) {
    %c0_i32 = arith.constant 0 : i32
    %c0_i32_0 = arith.constant 0 : i32
    %c0_i32_1 = arith.constant 0 : i32
    return %c0_i32, %c0_i32_0 : i32, i32
  }
  func.func @transform_5(%arg0: i32) -> (i32, i32) {
    %c0_i32 = arith.constant 0 : i32
    %c0_i32_0 = arith.constant 0 : i32
    %c0_i32_1 = arith.constant 0 : i32
    return %c0_i32, %c0_i32_0 : i32, i32
  }
  func.func @transform_6(%arg0: i32) -> (i32, i32) {
    %c0_i32 = arith.constant 0 : i32
    %c0_i32_0 = arith.constant 0 : i32
    %c0_i32_1 = arith.constant 0 : i32
    return %c0_i32, %c0_i32_0 : i32, i32
  }
  func.func @transform_7(%arg0: i32) -> (i32, i32) {
    %c0_i32 = arith.constant 0 : i32
    %c0_i32_0 = arith.constant 0 : i32
    %c0_i32_1 = arith.constant 0 : i32
    return %c0_i32, %c0_i32_0 : i32, i32
  }
  func.func @transform_8(%arg0: i32) -> (i32, i32) {
    %c0_i32 = arith.constant 0 : i32
    %c0_i32_0 = arith.constant 0 : i32
    %c0_i32_1 = arith.constant 0 : i32
    return %c0_i32, %c0_i32_0 : i32, i32
  }
  func.func @transform_9(%arg0: i32) -> (i32, i32) {
    %c0_i32 = arith.constant 0 : i32
    %c0_i32_0 = arith.constant 0 : i32
    return %arg0, %c0_i32 : i32, i32
  }
}

</mosaic_0001>

<llo_original>
// kernel: _forward_impl.1
$region0: #{_forward_impl.1}
  #allocation0 [shape = 'u32[]', space=smem, size = 0x4, offset = 0x4, fixed_abs, tag = 'smem constant byte address 0x4 - core index']
  #allocation1 [shape = 'u32[72,128]{1,0:T(1,128)}', space=vmem, size = 0x9000, scoped, tag = 'internal scratch']
  %s0 = inlined_call_operand.vmem [shape: f32[8,896], index: 0, kind: input, shape index: {}]
  %s1 = inlined_call_operand.hbm [shape: f32[896,128], index: 1, kind: input, shape index: {}]
  %s2 = inlined_call_operand.vmem [shape: f32[1,128], index: 2, kind: input, shape index: {}]
  %s3 = inlined_call_operand.vmem [shape: f32[128,128], index: 3, kind: input, shape index: {}]
  %s4 = inlined_call_operand.vmem [shape: f32[1,128], index: 4, kind: input, shape index: {}]
  %s5 = inlined_call_operand.hbm [shape: f32[128,128], index: 5, kind: input, shape index: {}]
  %s6 = inlined_call_operand.vmem [shape: f32[1,128], index: 6, kind: input, shape index: {}]
  %s7 = inlined_call_operand.hbm [shape: f32[128,128], index: 7, kind: input, shape index: {}]
  %s8 = inlined_call_operand.vmem [shape: f32[1,128], index: 8, kind: input, shape index: {}]
  %s9 = inlined_call_operand.hbm [shape: f32[8,128], index: 9, kind: output, shape index: {}]
  %s10 = sld [smem:[#allocation0]]
  $region58: #{_forward_impl.1} parent=0
    _
  %s12 = ssub.s32 1, %s10
  %s13 = scalar_select 0, %s12, %s10
  $region1: #{_forward_impl.1} parent=0
    #allocation2 [shape = 'u8[458752]{0}', space=vmem, size = 0x70000, scoped, tag = 'input window, operand 1, single buffered']
    #allocation3 [shape = 's32[1]{0}', space=sflag, size = 0x4, scoped, tag = 'scoped memory for _forward_impl.1']
    #allocation4 [shape = 's32[1]{0}', space=sflag, size = 0x4, scoped, tag = 'scoped memory for _forward_impl.1']
    #allocation5 [shape = 'u8[65536]{0}', space=vmem, size = 0x10000, scoped, tag = 'input window, operand 5, single buffered']
    #allocation6 [shape = 's32[1]{0}', space=sflag, size = 0x4, scoped, tag = 'scoped memory for _forward_impl.1']
    #allocation7 [shape = 'u8[65536]{0}', space=vmem, size = 0x10000, scoped, tag = 'input window, operand 7, single buffered']
    #allocation8 [shape = 'u8[4096]{0}', space=vmem, size = 0x1000, scoped, tag = 'output window, operand 0, single buffered']
    %14 = vsyncpa [#allocation3], 0
    %15 = vsyncpa [#allocation6], 0
    %16 = vsyncpa [#allocation4], 0
    // Predicated region
    $region2: #{_forward_impl.1} parent=1 // pred_check
      _
    $region3: #{_forward_impl.1} parent=1 // pred_check_branch
      %18 = sbr.rel (0) target = $region5
    $region4: #{_forward_impl.1} parent=1 // pred_region
      _
    $region5: #{_forward_impl.1} parent=1 // pred_fallthru
      _
    // Predicated region
    $region6: #{_forward_impl.1} parent=1 // pred_check
      _
    $region7: #{_forward_impl.1} parent=1 // pred_check_branch
      %20 = sbr.rel (0) target = $region9
    $region8: #{_forward_impl.1} parent=1 // pred_region
      %22 = vsyncadd [#allocation3], 0
      %s23 = sshll.u32 %s1, 4
      %s24 = int_to_ptr.hbm [resolvable:$true] %s23
      %s25 = sshll.u32 [#allocation2], 4
      %s26 = int_to_ptr.vmem [resolvable:$true] %s25
      %31 = dma.hbm_to_vmem [thread:$0]  %s24, 14336, %s26, [#allocation3], 128, 128, 8
    $region9: #{_forward_impl.1} parent=1 // pred_fallthru
      _
    // Predicated region
    $region10: #{_forward_impl.1} parent=1 // pred_check
      _
    $region11: #{_forward_impl.1} parent=1 // pred_check_branch
      %33 = sbr.rel (0) target = $region13
    $region12: #{_forward_impl.1} parent=1 // pred_region
      _
    $region13: #{_forward_impl.1} parent=1 // pred_fallthru
      _
    // Predicated region
    $region14: #{_forward_impl.1} parent=1 // pred_check
      _
    $region15: #{_forward_impl.1} parent=1 // pred_check_branch
      %35 = sbr.rel (0) target = $region17
    $region16: #{_forward_impl.1} parent=1 // pred_region
      _
    $region17: #{_forward_impl.1} parent=1 // pred_fallthru
      _
    // Predicated region
    $region18: #{_forward_impl.1} parent=1 // pred_check
      _
    $region19: #{_forward_impl.1} parent=1 // pred_check_branch
      %37 = sbr.rel (0) target = $region21
    $region20: #{_forward_impl.1} parent=1 // pred_region
      _
    $region21: #{_forward_impl.1} parent=1 // pred_fallthru
      _
    // Predicated region
    $region22: #{_forward_impl.1} parent=1 // pred_check
      _
    $region23: #{_forward_impl.1} parent=1 // pred_check_branch
      %39 = sbr.rel (0) target = $region25
    $region24: #{_forward_impl.1} parent=1 // pred_region
      %41 = vsyncadd [#allocation6], 0
      %s42 = sshll.u32 %s5, 4
      %s43 = int_to_ptr.hbm [resolvable:$true] %s42
      %s44 = sshll.u32 [#allocation5], 4
      %s45 = int_to_ptr.vmem [resolvable:$true] %s44
      %50 = dma.hbm_to_vmem [thread:$0]  %s43, 2048, %s45, [#allocation6], 128, 128, 8
    $region25: #{_forward_impl.1} parent=1 // pred_fallthru
      _
    // Predicated region
    $region26: #{_forward_impl.1} parent=1 // pred_check
      _
    $region27: #{_forward_impl.1} parent=1 // pred_check_branch
      %52 = sbr.rel (0) target = $region29
    $region28: #{_forward_impl.1} parent=1 // pred_region
      _
    $region29: #{_forward_impl.1} parent=1 // pred_fallthru
      _
    // Predicated region
    $region30: #{_forward_impl.1} parent=1 // pred_check
      _
    $region31: #{_forward_impl.1} parent=1 // pred_check_branch
      %54 = sbr.rel (0) target = $region33
    $region32: #{_forward_impl.1} parent=1 // pred_region
      %56 = vsyncadd [#allocation6], 0
      %s57 = sshll.u32 %s7, 4
      %s58 = int_to_ptr.hbm [resolvable:$true] %s57
      %s59 = sshll.u32 [#allocation7], 4
      %s60 = int_to_ptr.vmem [resolvable:$true] %s59
      %65 = dma.hbm_to_vmem [thread:$0]  %s58, 2048, %s60, [#allocation6], 128, 128, 8
    $region33: #{_forward_impl.1} parent=1 // pred_fallthru
      _
    // Predicated region
    $region34: #{_forward_impl.1} parent=1 // pred_check
      _
    $region35: #{_forward_impl.1} parent=1 // pred_check_branch
      %67 = sbr.rel (0) target = $region37
    $region36: #{_forward_impl.1} parent=1 // pred_region
      _
    $region37: #{_forward_impl.1} parent=1 // pred_fallthru
      _
    // Predicated region
    $region38: #{_forward_impl.1} parent=1 // pred_check
      _
    $region39: #{_forward_impl.1} parent=1 // pred_check_branch
      %69 = sbr.rel (0) target = $region41
    $region40: #{_forward_impl.1} parent=1 // pred_region
      %71 = dma.done [#allocation3], 14336
    $region41: #{_forward_impl.1} parent=1 // pred_fallthru
      _
    // Predicated region
    $region42: #{_forward_impl.1} parent=1 // pred_check
      _
    $region43: #{_forward_impl.1} parent=1 // pred_check_branch
      %73 = sbr.rel (0) target = $region45
    $region44: #{_forward_impl.1} parent=1 // pred_region
      %75 = dma.done [#allocation6], 2048
    $region45: #{_forward_impl.1} parent=1 // pred_fallthru
      _
    // Predicated region
    $region46: #{_forward_impl.1} parent=1 // pred_check
      _
    $region47: #{_forward_impl.1} parent=1 // pred_check_branch
      %77 = sbr.rel (0) target = $region49
    $region48: #{_forward_impl.1} parent=1 // pred_region
      %79 = dma.done [#allocation6], 2048
    $region49: #{_forward_impl.1} parent=1 // pred_fallthru
      _
    %v80 = vld [vmem:[%s0] sm:$0xff]
    %v81 = vld [vmem:[%s0 + $0x8] sm:$0xff]
    %v82 = vld [vmem:[%s0 + $0x10] sm:$0xff]
    %v83 = vld [vmem:[%s0 + $0x18] sm:$0xff]
    %v84 = vld [vmem:[%s0 + $0x20] sm:$0xff]
    %v85 = vld [vmem:[%s0 + $0x28] sm:$0xff]
    %v86 = vld [vmem:[%s0 + $0x30] sm:$0xff]
    %v87 = vld [vmem:[#allocation2] sm:$0xff]
    %v88 = vld [vmem:[#allocation2 + $0x8] sm:$0xff]
    %v89 = vld [vmem:[#allocation2 + $0x10] sm:$0xff]
    %v90 = vld [vmem:[#allocation2 + $0x18] sm:$0xff]
    %v91 = vld [vmem:[#allocation2 + $0x20] sm:$0xff]
    %v92 = vld [vmem:[#allocation2 + $0x28] sm:$0xff]
    %v93 = vld [vmem:[#allocation2 + $0x30] sm:$0xff]
    %v94 = vld [vmem:[#allocation2 + $0x38] sm:$0xff]
    %v95 = vld [vmem:[#allocation2 + $0x40] sm:$0xff]
    %v96 = vld [vmem:[#allocation2 + $0x48] sm:$0xff]
    %v97 = vld [vmem:[#allocation2 + $0x50] sm:$0xff]
    %v98 = vld [vmem:[#allocation2 + $0x58] sm:$0xff]
    %v99 = vld [vmem:[#allocation2 + $0x60] sm:$0xff]
    %v100 = vld [vmem:[#allocation2 + $0x68] sm:$0xff]
    %v101 = vld [vmem:[#allocation2 + $0x70] sm:$0xff]
    %v102 = vld [vmem:[#allocation2 + $0x78] sm:$0xff]
    %v103 = vld [vmem:[#allocation2 + $0x80] sm:$0xff]
    %v104 = vld [vmem:[#allocation2 + $0x88] sm:$0xff]
    %v105 = vld [vmem:[#allocation2 + $0x90] sm:$0xff]
    %v106 = vld [vmem:[#allocation2 + $0x98] sm:$0xff]
    %v107 = vld [vmem:[#allocation2 + $0xa0] sm:$0xff]
    %v108 = vld [vmem:[#allocation2 + $0xa8] sm:$0xff]
    %v109 = vld [vmem:[#allocation2 + $0xb0] sm:$0xff]
    %v110 = vld [vmem:[#allocation2 + $0xb8] sm:$0xff]
    %v111 = vld [vmem:[#allocation2 + $0xc0] sm:$0xff]
    %v112 = vld [vmem:[#allocation2 + $0xc8] sm:$0xff]
    %v113 = vld [vmem:[#allocation2 + $0xd0] sm:$0xff]
    %v114 = vld [vmem:[#allocation2 + $0xd8] sm:$0xff]
    %v115 = vld [vmem:[#allocation2 + $0xe0] sm:$0xff]
    %v116 = vld [vmem:[#allocation2 + $0xe8] sm:$0xff]
    %v117 = vld [vmem:[#allocation2 + $0xf0] sm:$0xff]
    %v118 = vld [vmem:[#allocation2 + $0xf8] sm:$0xff]
    %v119 = vld [vmem:[#allocation2 + $0x100] sm:$0xff]
    %v120 = vld [vmem:[#allocation2 + $0x108] sm:$0xff]
    %v121 = vld [vmem:[#allocation2 + $0x110] sm:$0xff]
    %v122 = vld [vmem:[#allocation2 + $0x118] sm:$0xff]
    %v123 = vld [vmem:[#allocation2 + $0x120] sm:$0xff]
    %v124 = vld [vmem:[#allocation2 + $0x128] sm:$0xff]
    %v125 = vld [vmem:[#allocation2 + $0x130] sm:$0xff]
    %v126 = vld [vmem:[#allocation2 + $0x138] sm:$0xff]
    %v127 = vld [vmem:[#allocation2 + $0x140] sm:$0xff]
    %v128 = vld [vmem:[#allocation2 + $0x148] sm:$0xff]
    %v129 = vld [vmem:[#allocation2 + $0x150] sm:$0xff]
    %v130 = vld [vmem:[#allocation2 + $0x158] sm:$0xff]
    %v131 = vld [vmem:[#allocation2 + $0x160] sm:$0xff]
    %v132 = vld [vmem:[#allocation2 + $0x168] sm:$0xff]
    %v133 = vld [vmem:[#allocation2 + $0x170] sm:$0xff]
    %v134 = vld [vmem:[#allocation2 + $0x178] sm:$0xff]
    %v135 = vld [vmem:[#allocation2 + $0x180] sm:$0xff]
    %v136 = vld [vmem:[#allocation2 + $0x188] sm:$0xff]
    %v137 = vld [vmem:[#allocation2 + $0x190] sm:$0xff]
    %v138 = vld [vmem:[#allocation2 + $0x198] sm:$0xff]
    %v139 = vld [vmem:[#allocation2 + $0x1a0] sm:$0xff]
    %v140 = vld [vmem:[#allocation2 + $0x1a8] sm:$0xff]
    %v141 = vld [vmem:[#allocation2 + $0x1b0] sm:$0xff]
    %v142 = vld [vmem:[#allocation2 + $0x1b8] sm:$0xff]
    %v143 = vld [vmem:[#allocation2 + $0x1c0] sm:$0xff]
    %v144 = vld [vmem:[#allocation2 + $0x1c8] sm:$0xff]
    %v145 = vld [vmem:[#allocation2 + $0x1d0] sm:$0xff]
    %v146 = vld [vmem:[#allocation2 + $0x1d8] sm:$0xff]
    %v147 = vld [vmem:[#allocation2 + $0x1e0] sm:$0xff]
    %v148 = vld [vmem:[#allocation2 + $0x1e8] sm:$0xff]
    %v149 = vld [vmem:[#allocation2 + $0x1f0] sm:$0xff]
    %v150 = vld [vmem:[#allocation2 + $0x1f8] sm:$0xff]
    %v151 = vld [vmem:[#allocation2 + $0x200] sm:$0xff]
    %v152 = vld [vmem:[#allocation2 + $0x208] sm:$0xff]
    %v153 = vld [vmem:[#allocation2 + $0x210] sm:$0xff]
    %v154 = vld [vmem:[#allocation2 + $0x218] sm:$0xff]
    %v155 = vld [vmem:[#allocation2 + $0x220] sm:$0xff]
    %v156 = vld [vmem:[#allocation2 + $0x228] sm:$0xff]
    %v157 = vld [vmem:[#allocation2 + $0x230] sm:$0xff]
    %v158 = vld [vmem:[#allocation2 + $0x238] sm:$0xff]
    %v159 = vld [vmem:[#allocation2 + $0x240] sm:$0xff]
    %v160 = vld [vmem:[#allocation2 + $0x248] sm:$0xff]
    %v161 = vld [vmem:[#allocation2 + $0x250] sm:$0xff]
    %v162 = vld [vmem:[#allocation2 + $0x258] sm:$0xff]
    %v163 = vld [vmem:[#allocation2 + $0x260] sm:$0xff]
    %v164 = vld [vmem:[#allocation2 + $0x268] sm:$0xff]
    %v165 = vld [vmem:[#allocation2 + $0x270] sm:$0xff]
    %v166 = vld [vmem:[#allocation2 + $0x278] sm:$0xff]
    %v167 = vld [vmem:[#allocation2 + $0x280] sm:$0xff]
    %v168 = vld [vmem:[#allocation2 + $0x288] sm:$0xff]
    %v169 = vld [vmem:[#allocation2 + $0x290] sm:$0xff]
    %v170 = vld [vmem:[#allocation2 + $0x298] sm:$0xff]
    %v171 = vld [vmem:[#allocation2 + $0x2a0] sm:$0xff]
    %v172 = vld [vmem:[#allocation2 + $0x2a8] sm:$0xff]
    %v173 = vld [vmem:[#allocation2 + $0x2b0] sm:$0xff]
    %v174 = vld [vmem:[#allocation2 + $0x2b8] sm:$0xff]
    %v175 = vld [vmem:[#allocation2 + $0x2c0] sm:$0xff]
    %v176 = vld [vmem:[#allocation2 + $0x2c8] sm:$0xff]
    %v177 = vld [vmem:[#allocation2 + $0x2d0] sm:$0xff]
    %v178 = vld [vmem:[#allocation2 + $0x2d8] sm:$0xff]
    %v179 = vld [vmem:[#allocation2 + $0x2e0] sm:$0xff]
    %v180 = vld [vmem:[#allocation2 + $0x2e8] sm:$0xff]
    %v181 = vld [vmem:[#allocation2 + $0x2f0] sm:$0xff]
    %v182 = vld [vmem:[#allocation2 + $0x2f8] sm:$0xff]
    %v183 = vld [vmem:[#allocation2 + $0x300] sm:$0xff]
    %v184 = vld [vmem:[#allocation2 + $0x308] sm:$0xff]
    %v185 = vld [vmem:[#allocation2 + $0x310] sm:$0xff]
    %v186 = vld [vmem:[#allocation2 + $0x318] sm:$0xff]
    %v187 = vld [vmem:[#allocation2 + $0x320] sm:$0xff]
    %v188 = vld [vmem:[#allocation2 + $0x328] sm:$0xff]
    %v189 = vld [vmem:[#allocation2 + $0x330] sm:$0xff]
    %v190 = vld [vmem:[#allocation2 + $0x338] sm:$0xff]
    %v191 = vld [vmem:[#allocation2 + $0x340] sm:$0xff]
    %v192 = vld [vmem:[#allocation2 + $0x348] sm:$0xff]
    %v193 = vld [vmem:[#allocation2 + $0x350] sm:$0xff]
    %v194 = vld [vmem:[#allocation2 + $0x358] sm:$0xff]
    %v195 = vld [vmem:[#allocation2 + $0x360] sm:$0xff]
    %v196 = vld [vmem:[#allocation2 + $0x368] sm:$0xff]
    %v197 = vld [vmem:[#allocation2 + $0x370] sm:$0xff]
    %v198 = vld [vmem:[#allocation2 + $0x378] sm:$0xff]
    %v199 = vld [vmem:[%s2] sm:$0x1]
    %v201 = vperm.slane %v199, 0
    %203 = vmatpush.msra.mxu0 %v102
    %204 = vmatpush.msra.mxu0 %v101
    %205 = vmatpush.msra.mxu0 %v100
    %206 = vmatpush.msra.mxu0 %v99
    %207 = vmatpush.msra.mxu0 %v98
    %208 = vmatpush.msra.mxu0 %v97
    %209 = vmatpush.msra.mxu0 %v96
    %210 = vmatpush.msra.mxu0 %v95
    %211 = vmatpush.msra.mxu0 %v94
    %212 = vmatpush.msra.mxu0 %v93
    %213 = vmatpush.msra.mxu0 %v92
    %214 = vmatpush.msra.mxu0 %v91
    %215 = vmatpush.msra.mxu0 %v90
    %216 = vmatpush.msra.mxu0 %v89
    %217 = vmatpush.msra.mxu0 %v88
    %218 = vmatpush.msra.mxu0 %v87
    %219 = vmatmul.f32.gmra.mxu0 %v80
    %v220 = vpop.f32.mrf.mxu0
    %v221 = vadd.f32 %v201, %v220
    %222 = vdwg.mxu0
    %223 = vmatpush.msra.mxu0 %v118
    %224 = vmatpush.msra.mxu0 %v117
    %225 = vmatpush.msra.mxu0 %v116
    %226 = vmatpush.msra.mxu0 %v115
    %227 = vmatpush.msra.mxu0 %v114
    %228 = vmatpush.msra.mxu0 %v113
    %229 = vmatpush.msra.mxu0 %v112
    %230 = vmatpush.msra.mxu0 %v111
    %231 = vmatpush.msra.mxu0 %v110
    %232 = vmatpush.msra.mxu0 %v109
    %233 = vmatpush.msra.mxu0 %v108
    %234 = vmatpush.msra.mxu0 %v107
    %235 = vmatpush.msra.mxu0 %v106
    %236 = vmatpush.msra.mxu0 %v105
    %237 = vmatpush.msra.mxu0 %v104
    %238 = vmatpush.msra.mxu0 %v103
    %239 = vmatmul.f32.gmra.mxu0 %v81
    %v240 = vpop.f32.mrf.mxu0
    %v241 = vadd.f32 %v221, %v240
    %242 = vdwg.mxu0
    %243 = vmatpush.msra.mxu0 %v134
    %244 = vmatpush.msra.mxu0 %v133
    %245 = vmatpush.msra.mxu0 %v132
    %246 = vmatpush.msra.mxu0 %v131
    %247 = vmatpush.msra.mxu0 %v130
    %248 = vmatpush.msra.mxu0 %v129
    %249 = vmatpush.msra.mxu0 %v128
    %250 = vmatpush.msra.mxu0 %v127
    %251 = vmatpush.msra.mxu0 %v126
    %252 = vmatpush.msra.mxu0 %v125
    %253 = vmatpush.msra.mxu0 %v124
    %254 = vmatpush.msra.mxu0 %v123
    %255 = vmatpush.msra.mxu0 %v122
    %256 = vmatpush.msra.mxu0 %v121
    %257 = vmatpush.msra.mxu0 %v120
    %258 = vmatpush.msra.mxu0 %v119
    %259 = vmatmul.f32.gmra.mxu0 %v82
    %v260 = vpop.f32.mrf.mxu0
    %v261 = vadd.f32 %v241, %v260
    %262 = vdwg.mxu0
    %263 = vmatpush.msra.mxu0 %v150
    %264 = vmatpush.msra.mxu0 %v149
    %265 = vmatpush.msra.mxu0 %v148
    %266 = vmatpush.msra.mxu0 %v147
    %267 = vmatpush.msra.mxu0 %v146
    %268 = vmatpush.msra.mxu0 %v145
    %269 = vmatpush.msra.mxu0 %v144
    %270 = vmatpush.msra.mxu0 %v143
    %271 = vmatpush.msra.mxu0 %v142
    %272 = vmatpush.msra.mxu0 %v141
    %273 = vmatpush.msra.mxu0 %v140
    %274 = vmatpush.msra.mxu0 %v139
    %275 = vmatpush.msra.mxu0 %v138
    %276 = vmatpush.msra.mxu0 %v137
    %277 = vmatpush.msra.mxu0 %v136
    %278 = vmatpush.msra.mxu0 %v135
    %279 = vmatmul.f32.gmra.mxu0 %v83
    %v280 = vpop.f32.mrf.mxu0
    %v281 = vadd.f32 %v261, %v280
    %282 = vdwg.mxu0
    %283 = vmatpush.msra.mxu0 %v166
    %284 = vmatpush.msra.mxu0 %v165
    %285 = vmatpush.msra.mxu0 %v164
    %286 = vmatpush.msra.mxu0 %v163
    %287 = vmatpush.msra.mxu0 %v162
    %288 = vmatpush.msra.mxu0 %v161
    %289 = vmatpush.msra.mxu0 %v160
    %290 = vmatpush.msra.mxu0 %v159
    %291 = vmatpush.msra.mxu0 %v158
    %292 = vmatpush.msra.mxu0 %v157
    %293 = vmatpush.msra.mxu0 %v156
    %294 = vmatpush.msra.mxu0 %v155
    %295 = vmatpush.msra.mxu0 %v154
    %296 = vmatpush.msra.mxu0 %v153
    %297 = vmatpush.msra.mxu0 %v152
    %298 = vmatpush.msra.mxu0 %v151
    %299 = vmatmul.f32.gmra.mxu0 %v84
    %v300 = vpop.f32.mrf.mxu0
    %v301 = vadd.f32 %v281, %v300
    %302 = vdwg.mxu0
    %303 = vmatpush.msra.mxu0 %v182
    %304 = vmatpush.msra.mxu0 %v181
    %305 = vmatpush.msra.mxu0 %v180
    %306 = vmatpush.msra.mxu0 %v179
    %307 = vmatpush.msra.mxu0 %v178
    %308 = vmatpush.msra.mxu0 %v177
    %309 = vmatpush.msra.mxu0 %v176
    %310 = vmatpush.msra.mxu0 %v175
    %311 = vmatpush.msra.mxu0 %v174
    %312 = vmatpush.msra.mxu0 %v173
    %313 = vmatpush.msra.mxu0 %v172
    %314 = vmatpush.msra.mxu0 %v171
    %315 = vmatpush.msra.mxu0 %v170
    %316 = vmatpush.msra.mxu0 %v169
    %317 = vmatpush.msra.mxu0 %v168
    %318 = vmatpush.msra.mxu0 %v167
    %319 = vmatmul.f32.gmra.mxu0 %v85
    %v320 = vpop.f32.mrf.mxu0
    %v321 = vadd.f32 %v301, %v320
    %322 = vdwg.mxu0
    %323 = vmatpush.msra.mxu0 %v198
    %324 = vmatpush.msra.mxu0 %v197
    %325 = vmatpush.msra.mxu0 %v196
    %326 = vmatpush.msra.mxu0 %v195
    %327 = vmatpush.msra.mxu0 %v194
    %328 = vmatpush.msra.mxu0 %v193
    %329 = vmatpush.msra.mxu0 %v192
    %330 = vmatpush.msra.mxu0 %v191
    %331 = vmatpush.msra.mxu0 %v190
    %332 = vmatpush.msra.mxu0 %v189
    %333 = vmatpush.msra.mxu0 %v188
    %334 = vmatpush.msra.mxu0 %v187
    %335 = vmatpush.msra.mxu0 %v186
    %336 = vmatpush.msra.mxu0 %v185
    %337 = vmatpush.msra.mxu0 %v184
    %338 = vmatpush.msra.mxu0 %v183
    %339 = vmatmul.f32.gmra.mxu0 %v86
    %v340 = vpop.f32.mrf.mxu0
    %v341 = vadd.f32 %v321, %v340
    %342 = vdwg.mxu0
    %v343 = vmax.f32 %v341, 0.0
    %v344 = vld [vmem:[%s3] sm:$0xff]
    %v345 = vld [vmem:[%s3 + $0x8] sm:$0xff]
    %v346 = vld [vmem:[%s3 + $0x10] sm:$0xff]
    %v347 = vld [vmem:[%s3 + $0x18] sm:$0xff]
    %v348 = vld [vmem:[%s3 + $0x20] sm:$0xff]
    %v349 = vld [vmem:[%s3 + $0x28] sm:$0xff]
    %v350 = vld [vmem:[%s3 + $0x30] sm:$0xff]
    %v351 = vld [vmem:[%s3 + $0x38] sm:$0xff]
    %v352 = vld [vmem:[%s3 + $0x40] sm:$0xff]
    %v353 = vld [vmem:[%s3 + $0x48] sm:$0xff]
    %v354 = vld [vmem:[%s3 + $0x50] sm:$0xff]
    %v355 = vld [vmem:[%s3 + $0x58] sm:$0xff]
    %v356 = vld [vmem:[%s3 + $0x60] sm:$0xff]
    %v357 = vld [vmem:[%s3 + $0x68] sm:$0xff]
    %v358 = vld [vmem:[%s3 + $0x70] sm:$0xff]
    %v359 = vld [vmem:[%s3 + $0x78] sm:$0xff]
    %v360 = vld [vmem:[%s4] sm:$0x1]
    %v362 = vperm.slane %v360, 0
    %364 = vmatpush.msra.mxu0 %v359
    %365 = vmatpush.msra.mxu0 %v358
    %366 = vmatpush.msra.mxu0 %v357
    %367 = vmatpush.msra.mxu0 %v356
    %368 = vmatpush.msra.mxu0 %v355
    %369 = vmatpush.msra.mxu0 %v354
    %370 = vmatpush.msra.mxu0 %v353
    %371 = vmatpush.msra.mxu0 %v352
    %372 = vmatpush.msra.mxu0 %v351
    %373 = vmatpush.msra.mxu0 %v350
    %374 = vmatpush.msra.mxu0 %v349
    %375 = vmatpush.msra.mxu0 %v348
    %376 = vmatpush.msra.mxu0 %v347
    %377 = vmatpush.msra.mxu0 %v346
    %378 = vmatpush.msra.mxu0 %v345
    %379 = vmatpush.msra.mxu0 %v344
    %380 = vmatmul.f32.gmra.mxu0 %v343
    %v381 = vpop.f32.mrf.mxu0
    %v382 = vadd.f32 %v362, %v381
    %383 = vdwg.mxu0
    %v384 = vmax.f32 %v382, 0.0
    %v385 = vld [vmem:[#allocation5] sm:$0xff]
    %v386 = vld [vmem:[#allocation5 + $0x8] sm:$0xff]
    %v387 = vld [vmem:[#allocation5 + $0x10] sm:$0xff]
    %v388 = vld [vmem:[#allocation5 + $0x18] sm:$0xff]
    %v389 = vld [vmem:[#allocation5 + $0x20] sm:$0xff]
    %v390 = vld [vmem:[#allocation5 + $0x28] sm:$0xff]
    %v391 = vld [vmem:[#allocation5 + $0x30] sm:$0xff]
    %v392 = vld [vmem:[#allocation5 + $0x38] sm:$0xff]
    %v393 = vld [vmem:[#allocation5 + $0x40] sm:$0xff]
    %v394 = vld [vmem:[#allocation5 + $0x48] sm:$0xff]
    %v395 = vld [vmem:[#allocation5 + $0x50] sm:$0xff]
    %v396 = vld [vmem:[#allocation5 + $0x58] sm:$0xff]
    %v397 = vld [vmem:[#allocation5 + $0x60] sm:$0xff]
    %v398 = vld [vmem:[#allocation5 + $0x68] sm:$0xff]
    %v399 = vld [vmem:[#allocation5 + $0x70] sm:$0xff]
    %v400 = vld [vmem:[#allocation5 + $0x78] sm:$0xff]
    %v401 = vld [vmem:[%s6] sm:$0x1]
    %v403 = vperm.slane %v401, 0
    %405 = vmatpush.msra.mxu0 %v400
    %406 = vmatpush.msra.mxu0 %v399
    %407 = vmatpush.msra.mxu0 %v398
    %408 = vmatpush.msra.mxu0 %v397
    %409 = vmatpush.msra.mxu0 %v396
    %410 = vmatpush.msra.mxu0 %v395
    %411 = vmatpush.msra.mxu0 %v394
    %412 = vmatpush.msra.mxu0 %v393
    %413 = vmatpush.msra.mxu0 %v392
    %414 = vmatpush.msra.mxu0 %v391
    %415 = vmatpush.msra.mxu0 %v390
    %416 = vmatpush.msra.mxu0 %v389
    %417 = vmatpush.msra.mxu0 %v388
    %418 = vmatpush.msra.mxu0 %v387
    %419 = vmatpush.msra.mxu0 %v386
    %420 = vmatpush.msra.mxu0 %v385
    %421 = vmatmul.f32.gmra.mxu0 %v384
    %v422 = vpop.f32.mrf.mxu0
    %v423 = vadd.f32 %v403, %v422
    %424 = vdwg.mxu0
    %v425 = vmax.f32 %v423, 0.0
    %v426 = vld [vmem:[#allocation7] sm:$0xff]
    %v427 = vld [vmem:[#allocation7 + $0x8] sm:$0xff]
    %v428 = vld [vmem:[#allocation7 + $0x10] sm:$0xff]
    %v429 = vld [vmem:[#allocation7 + $0x18] sm:$0xff]
    %v430 = vld [vmem:[#allocation7 + $0x20] sm:$0xff]
    %v431 = vld [vmem:[#allocation7 + $0x28] sm:$0xff]
    %v432 = vld [vmem:[#allocation7 + $0x30] sm:$0xff]
    %v433 = vld [vmem:[#allocation7 + $0x38] sm:$0xff]
    %v434 = vld [vmem:[#allocation7 + $0x40] sm:$0xff]
    %v435 = vld [vmem:[#allocation7 + $0x48] sm:$0xff]
    %v436 = vld [vmem:[#allocation7 + $0x50] sm:$0xff]
    %v437 = vld [vmem:[#allocation7 + $0x58] sm:$0xff]
    %v438 = vld [vmem:[#allocation7 + $0x60] sm:$0xff]
    %v439 = vld [vmem:[#allocation7 + $0x68] sm:$0xff]
    %v440 = vld [vmem:[#allocation7 + $0x70] sm:$0xff]
    %v441 = vld [vmem:[#allocation7 + $0x78] sm:$0xff]
    %v442 = vld [vmem:[%s8] sm:$0x1]
    %v444 = vperm.slane %v442, 0
    %446 = vmatpush.msra.mxu0 %v441
    %447 = vmatpush.msra.mxu0 %v440
    %448 = vmatpush.msra.mxu0 %v439
    %449 = vmatpush.msra.mxu0 %v438
    %450 = vmatpush.msra.mxu0 %v437
    %451 = vmatpush.msra.mxu0 %v436
    %452 = vmatpush.msra.mxu0 %v435
    %453 = vmatpush.msra.mxu0 %v434
    %454 = vmatpush.msra.mxu0 %v433
    %455 = vmatpush.msra.mxu0 %v432
    %456 = vmatpush.msra.mxu0 %v431
    %457 = vmatpush.msra.mxu0 %v430
    %458 = vmatpush.msra.mxu0 %v429
    %459 = vmatpush.msra.mxu0 %v428
    %460 = vmatpush.msra.mxu0 %v427
    %461 = vmatpush.msra.mxu0 %v426
    %462 = vmatmul.f32.gmra.mxu0 %v425
    %v463 = vpop.f32.mrf.mxu0
    %v464 = vadd.f32 %v444, %v463
    %465 = vdwg.mxu0
    %466 = vmax.xlane.f32.xlu0 %v464
    %v467 = vpop.xlane.xlu0 %466
    %v468 = vsub.f32 %v464, %v467
    %v469 = vmul.f32 %v468, 1.442695
    %v470 = vpow.pop %v469
    %471 = vadd.xlane.f32.xlu0 %v470
    %v472 = vpop.xlane.xlu0 %471
    %v473 = vlog2.pop %v472
    %v474 = vmul.f32 %v473, 0.6931472
    %v475 = vsub.f32 %v468, %v474
    %476 = vst [vmem:[#allocation8] sm:$0xff] %v475
    // Predicated region
    $region50: #{_forward_impl.1} parent=1 // pred_check
      _
    $region51: #{_forward_impl.1} parent=1 // pred_check_branch
      %478 = sbr.rel (0) target = $region53
    $region52: #{_forward_impl.1} parent=1 // pred_region
      %480 = vsyncadd [#allocation4], 0
      %s482 = sshll.u32 [#allocation8], 4
      %s483 = int_to_ptr.vmem [resolvable:$true] %s482
      %s484 = sshll.u32 %s9, 4
      %s485 = int_to_ptr.hbm [resolvable:$true] %s484
      %487 = dma.vmem_to_hbm [thread:$0]  %s483, 128, %s485, [#allocation4]
    $region53: #{_forward_impl.1} parent=1 // pred_fallthru
      _
    // Predicated region
    $region54: #{_forward_impl.1} parent=1 // pred_check
      _
    $region55: #{_forward_impl.1} parent=1 // pred_check_branch
      %489 = sbr.rel (0) target = $region57
    $region56: #{_forward_impl.1} parent=1 // pred_region
      %491 = dma.done [#allocation4], 128
    $region57: #{_forward_impl.1} parent=1 // pred_fallthru
      _
    %492 = vsyncpa [#allocation3], 1
    %493 = vsyncpa [#allocation6], 1
    %494 = vsyncpa [#allocation4], 1

</llo_original>
